<compile_context>
chip_gen: v7x
topology: tpu7x:2x2x1
jax: 0.10.0
libtpu: 0.0.40
codegen_flags: <defaults>
</compile_context>

<pallas_src>
import math
import functools

import jax
import jax.numpy as jnp
from jax.experimental import pallas as pl
from jax.experimental.pallas import tpu as pltpu


_SUBLANE_PACK = {1: 32, 2: 16, 4: 8}   # sublane multiple per itemsize (int8 / bf16 / f32)


def _pe_add_kernel(x_ref, pe_ref, o_ref):
    # x_ref / pe_ref / o_ref: (row_tile, lane_tile) blocks of identical shape.
    o_ref[...] = x_ref[...] + pe_ref[...]


def _largest_divisor_le(n, cap, mult=1):
    """Largest divisor of n that is <= cap and a multiple of `mult` (0 if none)."""
    best = 0
    d = 1
    while d * d <= n:
        if n % d == 0:
            for c in (d, n // d):
                if c <= cap and c % mult == 0 and c > best:
                    best = c
        d += 1
    return best


def _fold_seq(seq_len, d_model):
    """Split S = S1*S2 with (S2*D) % 128 == 0 and S2 minimal (falls back to S2=S)."""
    for s2 in range(1, seq_len + 1):
        if seq_len % s2 == 0 and (s2 * d_model) % 128 == 0:
            return seq_len // s2, s2
    return 1, seq_len


def _pick_tiles(batch, s1, lanes, itemsize):
    """Choose (row_tile, lane_tile, pe_period) for the (batch*s1, lanes) add.

    row_tile divides batch*s1 and lane_tile divides lanes; blocks target ~2 MiB
    (hard-capped at ~4 MiB) so double-buffered x/out/pe blocks stay well inside
    the 32 MiB scoped-VMEM ceiling.  pe_period == 1 means the PE operand is
    pre-tiled to row_tile rows and its block stays resident across the inner
    grid axis; pe_period > 1 means the PE block is picked via `row_block % period`.
    """
    m = _SUBLANE_PACK.get(itemsize, 8)
    rows = batch * s1
    target = (2 * 1024 * 1024) // itemsize           # ~2 MiB block, in elements
    hard = (4 * 1024 * 1024) // itemsize             # never exceed ~4 MiB

    # Lane tile: largest multiple of 128 dividing `lanes`, leaving room for at
    # least `m` rows inside the block budget.  If `lanes` is not a multiple of
    # 128 (the fold found no usable factor), the full extent is the only legal
    # choice (assumed modest in that case).
    if lanes % 128 == 0:
        lane_tile = _largest_divisor_le(lanes, max(128, min(lanes, target // m)), 128)
    else:
        lane_tile = lanes
    row_budget = max(1, target // lane_tile)

    # Row tile: prefer covering whole PE periods (k copies of s1 rows, k | batch)
    # so the PE block index is constant along the inner grid axis (resident).
    # k0 = smallest such k giving sublane-pack alignment.
    k0 = 0
    d = 1
    while d * d <= batch:
        if batch % d == 0:
            for c in (d, batch // d):
                if (c * s1) % m == 0 and (k0 == 0 or c < k0):
                    k0 = c
        d += 1
    k0 = k0 or 1

    period = 1
    if k0 * s1 <= row_budget:
        # Grow k toward the block-size target (k stays a multiple of k0, k | batch).
        k = k0
        d = 1
        while d * d <= batch:
            if batch % d == 0:
                for c in (d, batch // d):
                    if c % k0 == 0 and c * s1 <= row_budget and c > k:
                        k = c
            d += 1
        row_tile = k * s1
    elif k0 * s1 * lane_tile <= hard:
        row_tile = k0 * s1
    else:
        # s1 alone is too large for one block: split the PE period (the PE
        # block is then re-fetched per row block, an acceptable extra read).
        cap_rows = max(m, hard // lane_tile)
        rt = _largest_divisor_le(s1, min(s1, cap_rows), m)
        if rt:
            row_tile, period = rt, s1 // rt
        else:
            row_tile = k0 * s1                        # pathological shape; stay legal

    # Layout legality: the sublane block dim must be a multiple of the pack
    # size or equal the full extent.
    if row_tile % m != 0 and row_tile != rows:
        row_tile, period = rows, 1
        if lanes % 128 == 0:
            lane_tile = _largest_divisor_le(
                lanes, max(128, min(lanes, hard // row_tile)), 128)

    # v7x has two TensorCores: expose >= 2 blocks when the block is big enough
    # for the split to matter (>= 512 KiB).
    if (rows // row_tile) * (lanes // lane_tile) == 1 and \
            row_tile * lane_tile * itemsize >= (1 << 19):
        if period == 1 and (row_tile // s1) % 2 == 0 and (row_tile // 2) % m == 0:
            row_tile //= 2
        elif lane_tile % 256 == 0:
            lane_tile //= 2

    return row_tile, lane_tile, period


@functools.lru_cache(maxsize=None)
def _build_forward(batch, seq_len, d_model, dtype):
    """Build (and cache) the jitted Pallas forward for one (shape, dtype) config."""
    s1, s2 = _fold_seq(seq_len, d_model)
    rows, lanes = batch * s1, s2 * d_model
    row_tile, lane_tile, period = _pick_tiles(batch, s1, lanes, dtype.itemsize)
    pe_rows = row_tile if period == 1 else s1
    grid = (lanes // lane_tile, rows // row_tile)     # lane axis outer, row axis inner

    if period == 1:
        pe_index = lambda j, i: (0, j)                # constant along inner axis -> resident
    else:
        pe_index = lambda j, i: (i % period, j)

    call = pl.pallas_call(
        _pe_add_kernel,
        out_shape=jax.ShapeDtypeStruct((rows, lanes), dtype),
        grid_spec=pltpu.PrefetchScalarGridSpec(
            num_scalar_prefetch=0,
            grid=grid,
            in_specs=[
                pl.BlockSpec((row_tile, lane_tile), lambda j, i: (i, j)),   # x
                pl.BlockSpec((row_tile, lane_tile), pe_index),              # pe (shared)
            ],
            out_specs=pl.BlockSpec((row_tile, lane_tile), lambda j, i: (i, j)),
        ),
        compiler_params=pltpu.CompilerParams(
            dimension_semantics=("parallel", "parallel"),
            vmem_limit_bytes=32 * 1024 * 1024,        # v7x-safe scoped-VMEM ceiling
        ),
    )

    @jax.jit
    def forward(x, pe_arg):
        out2d = call(x.reshape(rows, lanes), pe_arg)  # reshapes fuse into the jit (free views)
        return out2d.reshape(batch, seq_len, d_model)

    return forward, (s1, lanes, pe_rows)


class PositionalEncoding:
    """JAX/Pallas port of the PyTorch sinusoidal position-table add (forward only)."""

    def __init__(self, d_model, max_len=128):
        assert d_model % 2 == 0, "d_model must be even (same limitation as the PyTorch module)"
        self.d_model = d_model
        self.max_len = max_len
        position = jnp.arange(max_len, dtype=jnp.float32)[:, None]                 # (max_len, 1)
        div_term = jnp.exp(jnp.arange(0, d_model, 2, dtype=jnp.float32)
                           * (-math.log(10000.0) / d_model))                       # (d_model/2,)
        angles = position * div_term                                               # (max_len, d/2)
        pe = jnp.zeros((max_len, d_model), dtype=jnp.float32)
        pe = pe.at[:, 0::2].set(jnp.sin(angles))
        pe = pe.at[:, 1::2].set(jnp.cos(angles))
        self.pe = pe[None, :, :]                      # (1, max_len, d_model), float32
        self._pe_cache = {}                           # (S, dtype, pe_rows) -> 2D PE operand

    def _pe_operand(self, seq_len, dtype, s1, lanes, pe_rows):
        key = (seq_len, dtype, pe_rows)
        cached = self._pe_cache.get(key)
        if cached is None:
            pe2d = self.pe[0, :seq_len, :].astype(dtype).reshape(s1, lanes)
            if pe_rows != s1:
                pe2d = jnp.tile(pe2d, (pe_rows // s1, 1))
            cached = jax.block_until_ready(pe2d)      # built once, reused every call
            self._pe_cache[key] = cached
        return cached

    def __call__(self, x):
        batch, seq_len, d_model = x.shape
        assert d_model == self.d_model, "last dim of x must equal d_model"
        assert seq_len <= self.max_len, f"sequence length {seq_len} exceeds max_len {self.max_len}"
        forward, (s1, lanes, pe_rows) = _build_forward(batch, seq_len, d_model, x.dtype)
        pe_arg = self._pe_operand(seq_len, x.dtype, s1, lanes, pe_rows)
        return forward(x, pe_arg)


if __name__ == "__main__":
    B, S, D = 2, 8, 32
    MAX_LEN = 128

    key = jax.random.PRNGKey(0)
    x = jax.random.normal(key, (B, S, D), dtype=jnp.float32)

    module = PositionalEncoding(D, MAX_LEN)
    out = jax.block_until_ready(module(x))

    ref = x + module.pe[:, :S, :]
    assert out.shape == (B, S, D)
    assert jnp.allclose(out, ref, atol=1e-6, rtol=1e-6), "f32 mismatch"

    # second shape: lane-dense d_model (exercises the (B*S, D) fold path)
    x2 = jax.random.normal(jax.random.PRNGKey(1), (2, 16, 128), dtype=jnp.float32)
    module2 = PositionalEncoding(128, MAX_LEN)
    out2 = jax.block_until_ready(module2(x2))
    ref2 = x2 + module2.pe[:, :16, :]
    assert jnp.allclose(out2, ref2, atol=1e-6, rtol=1e-6), "f32 lane-dense mismatch"

    # bf16 path: PE is pre-cast to the input dtype (dtype-aware sublane tiling)
    x_bf = x.astype(jnp.bfloat16)
    out_bf = jax.block_until_ready(module(x_bf))
    ref_bf = x_bf + module.pe[:, :S, :].astype(jnp.bfloat16)
    assert out_bf.dtype == jnp.bfloat16
    assert jnp.allclose(out_bf.astype(jnp.float32), ref_bf.astype(jnp.float32),
                        atol=1e-2, rtol=1e-2), "bf16 mismatch"

    print("KERNEL_OK")
</pallas_src>

<mosaic_0001>
module attributes {stable_mosaic.version = 11 : i64} {
  func.func @_pe_add_kernel(%arg0: i32, %arg1: i32, %arg2: memref<4x128xf32, #tpu.memory_space<vmem>>, %arg3: memref<4x128xf32, #tpu.memory_space<vmem>>, %arg4: memref<4x128xf32, #tpu.memory_space<vmem>>) attributes {dimension_semantics = [#tpu.dimension_semantics<parallel>, #tpu.dimension_semantics<parallel>], iteration_bounds = array<i64: 1, 1>, scalar_prefetch = 0 : i64, scratch_operands = 0 : i64, tpu.core_type = #tpu.core_type<tc>, window_params = [{transform_indices = @transform_0, window_bounds = array<i64: 4, 128>}, {transform_indices = @transform_1, window_bounds = array<i64: 4, 128>}, {transform_indices = @transform_2, window_bounds = array<i64: 4, 128>}]} {
    %c0 = arith.constant 0 : index
    %c0_0 = arith.constant 0 : index
    %0 = vector.load %arg2[%c0, %c0_0] : memref<4x128xf32, #tpu.memory_space<vmem>>, vector<4x128xf32>
    %c0_1 = arith.constant 0 : index
    %c0_2 = arith.constant 0 : index
    %1 = vector.load %arg3[%c0_1, %c0_2] : memref<4x128xf32, #tpu.memory_space<vmem>>, vector<4x128xf32>
    %2 = arith.addf %0, %1 : vector<4x128xf32>
    %c0_3 = arith.constant 0 : index
    %c0_4 = arith.constant 0 : index
    %3 = vector.load %arg4[%c0_3, %c0_4] : memref<4x128xf32, #tpu.memory_space<vmem>>, vector<4x128xf32>
    tpu.vector_store %arg4[%c0_3, %c0_4], %2 {strides = array<i32>} : memref<4x128xf32, #tpu.memory_space<vmem>>, vector<4x128xf32>,
    return
  }
  func.func @transform_0(%arg0: i32, %arg1: i32) -> (i32, i32) {
    %c0_i32 = arith.constant 0 : i32
    return %arg1, %arg0 : i32, i32
  }
  func.func @transform_1(%arg0: i32, %arg1: i32) -> (i32, i32) {
    %c0_i32 = arith.constant 0 : i32
    %c0_i32_0 = arith.constant 0 : i32
    return %c0_i32, %arg0 : i32, i32
  }
  func.func @transform_2(%arg0: i32, %arg1: i32) -> (i32, i32) {
    %c0_i32 = arith.constant 0 : i32
    return %arg1, %arg0 : i32, i32
  }
}

</mosaic_0001>

<llo_original>
// kernel: forward.1
$region0: #{forward.1}
  #allocation0 [shape = 'u32[]', space=smem, size = 0x4, offset = 0x4, fixed_abs, tag = 'smem constant byte address 0x4 - core index']
  #allocation1 [shape = 'u32[144,128]{1,0:T(1,128)}', space=vmem, size = 0x12000, scoped, tag = 'internal scratch']
  %s0 = inlined_call_operand.vmem [shape: f32[4,128], index: 0, kind: input, shape index: {}]
  %s1 = inlined_call_operand.vmem [shape: f32[4,128], index: 1, kind: input, shape index: {}]
  %s2 = inlined_call_operand.vmem [shape: f32[4,128], index: 2, kind: output, shape index: {}]
  %s3 = sld [smem:[#allocation0]]
  $region18: #{forward.1} parent=0
    _
  %s5 = ssub.s32 1, %s3
  %s6 = scalar_select 0, %s5, %s3
  // Predicated region
  $region2: #{forward.1} parent=0 // pred_check
    _
  $region3: #{forward.1} parent=0 // pred_check_branch
    %8 = sbr.rel (0) target = $region5
  $region4: #{forward.1} parent=0 // pred_region
    _
  $region5: #{forward.1} parent=0 // pred_fallthru
    _
  // Predicated region
  $region6: #{forward.1} parent=0 // pred_check
    _
  $region7: #{forward.1} parent=0 // pred_check_branch
    %10 = sbr.rel (0) target = $region9
  $region8: #{forward.1} parent=0 // pred_region
    _
  $region9: #{forward.1} parent=0 // pred_fallthru
    _
  %v11 = vld [vmem:[%s0] sm:$0xf]
  %v12 = vld [vmem:[%s1] sm:$0xf]
  %v13 = vadd.f32 %v11, %v12
  %14 = vst [vmem:[%s2] sm:$0xf] %v13
  // Predicated region
  $region10: #{forward.1} parent=0 // pred_check
    _
  $region11: #{forward.1} parent=0 // pred_check_branch
    %16 = sbr.rel (0) target = $region13
  $region12: #{forward.1} parent=0 // pred_region
    _
  $region13: #{forward.1} parent=0 // pred_fallthru
    _
  // Predicated region
  $region14: #{forward.1} parent=0 // pred_check
    _
  $region15: #{forward.1} parent=0 // pred_check_branch
    %18 = sbr.rel (0) target = $region17
  $region16: #{forward.1} parent=0 // pred_region
    _
  $region17: #{forward.1} parent=0 // pred_fallthru
    _

</llo_original>
